<compile_context>
chip_gen: v7x
topology: tpu7x:2x2x1
jax: 0.10.0
libtpu: 0.0.40
codegen_flags: <defaults>
</compile_context>

<pallas_src>
import functools

import jax
import jax.numpy as jnp
from jax.experimental import pallas as pl
from jax.experimental.pallas import tpu as pltpu

LANES = 128                    # TPU lane width (last dim of every tile)
CHUNK_ROWS = 128               # rows per in-kernel accumulation sub-chunk
VMEM_LIMIT = 32 * 1024 * 1024  # scoped VMEM headroom (<= physical on all gens)


def _cdiv(a, b):
    return -(-a // b)


def _round_up(a, b):
    return _cdiv(a, b) * b


def _chip_config():
    """Pick (max_tile_rows, ncores, use_core_parallel) for the local TPU."""
    kind = ""
    try:
        kind = jax.devices()[0].device_kind.lower()
    except Exception:
        pass
    is_v5e = ("v5e" in kind) or ("v5 lite" in kind) or ("v5lite" in kind)
    is_v7 = ("v7" in kind) or ("tpu7" in kind) or ("7x" in kind)
    # 8192x128 f32 = 4 MiB/input (2 inputs x 2 buffers = 16 MiB) on v6e/v7x;
    # cap v5e at 4096 rows (8 MiB of input buffering) for its smaller budget.
    max_tile_rows = 4096 if is_v5e else 8192
    ncores = 2 if is_v7 else 1          # only v7x has 2 TensorCores per chip
    return max_tile_rows, ncores, is_v7


def _ss_sums_kernel(x_ref, t_ref, acc_ref, *, tile_rows, chunk_rows, rows,
                    inner, needs_mask):
    """Accumulate lane-wise partial sums of x*t, x and t.

    x_ref, t_ref : (tile_rows, LANES) input tiles (upcast to f32 in-kernel).
    acc_ref      : (3, 8, LANES) f32 resident accumulator (one block per core):
                   acc[0] += partials of sum(x*t)
                   acc[1] += partials of sum(x)
                   acc[2] += partials of sum(t)
    """
    c = pl.program_id(0)
    i = pl.program_id(1)

    @pl.when(i == 0)
    def _():
        acc_ref[...] = jnp.zeros_like(acc_ref)

    n_chunks = tile_rows // chunk_rows
    block_row0 = (c * inner + i) * tile_rows   # unclamped global row offset

    def _fold(a):
        # (chunk_rows, LANES) -> (8, LANES) partials: pure VPU adds, no
        # cross-lane (XLU) reduction in the hot loop.
        return a.reshape(chunk_rows // 8, 8, LANES).sum(axis=0)

    def _load(r0, mask_rows):
        x = x_ref[pl.ds(r0, chunk_rows), :].astype(jnp.float32)
        t = t_ref[pl.ds(r0, chunk_rows), :].astype(jnp.float32)
        if mask_rows:
            # Zero rows past the true row count (partial last block and fully
            # out-of-range blocks read through the clamped index map).
            row_idx = (block_row0 + r0
                       + jax.lax.broadcasted_iota(jnp.int32, (chunk_rows, 1), 0))
            valid = row_idx < rows
            x = jnp.where(valid, x, 0.0)
            t = jnp.where(valid, t, 0.0)
        return x, t

    def _accumulate(mask_rows):
        def step(ci, carry):
            a_xt, a_x, a_t = carry
            r0 = pl.multiple_of(ci * chunk_rows, chunk_rows)
            x, t = _load(r0, mask_rows)
            return a_xt + _fold(x * t), a_x + _fold(x), a_t + _fold(t)

        if n_chunks == 1:
            x, t = _load(0, mask_rows)
            a_xt, a_x, a_t = _fold(x * t), _fold(x), _fold(t)
        else:
            zeros = jnp.zeros((8, LANES), jnp.float32)
            a_xt, a_x, a_t = jax.lax.fori_loop(
                0, n_chunks, step, (zeros, zeros, zeros),
                unroll=min(n_chunks, 8))
        acc_ref[0, :, :] += a_xt
        acc_ref[1, :, :] += a_x
        acc_ref[2, :, :] += a_t

    if not needs_mask:
        _accumulate(mask_rows=False)
    else:
        # Hot path: fully in-range tiles skip the iota + selects entirely.
        full = (block_row0 + tile_rows) <= rows

        @pl.when(full)
        def _():
            _accumulate(mask_rows=False)

        @pl.when(jnp.logical_not(full))
        def _():
            _accumulate(mask_rows=True)


def ssloss(inputs, target):
    """Pallas implementation of ssloss.forward(input, target) -> scalar f32."""
    assert inputs.shape == target.shape
    n = inputs.size
    assert n > 0

    # No wrapper-side casts/pads: contiguous reshape only.
    flat_x = inputs.reshape(-1)
    flat_t = target.reshape(-1)

    rows = n // LANES
    aligned = rows * LANES

    # Sub-lane tail (< 128 elements): summed with plain jnp and added to the
    # kernel totals instead of a full-array jnp.pad copy.
    if aligned < n:
        tx = flat_x[aligned:].astype(jnp.float32)
        tt = flat_t[aligned:].astype(jnp.float32)
        tail = jnp.stack([jnp.sum(tx * tt), jnp.sum(tx), jnp.sum(tt)])
    else:
        tail = jnp.zeros((3,), jnp.float32)

    if rows == 0:
        totals = tail
    else:
        main_x = flat_x if aligned == n else flat_x[:aligned]
        main_t = flat_t if aligned == n else flat_t[:aligned]
        x2d = main_x.reshape(rows, LANES)
        t2d = main_t.reshape(rows, LANES)

        max_tile_rows, ncores_cfg, use_core_parallel = _chip_config()

        if rows >= CHUNK_ROWS:
            tile_rows = min(max_tile_rows, _round_up(rows, CHUNK_ROWS))
            chunk_rows = CHUNK_ROWS
        else:
            tile_rows = _round_up(rows, 8)
            chunk_rows = tile_rows

        row_blocks = _cdiv(rows, tile_rows)
        ncores = min(ncores_cfg, row_blocks)
        inner = _cdiv(row_blocks, ncores)
        needs_mask = ncores * inner * tile_rows > rows

        def in_map(c, i):
            # Clamp so the DMA never reads past the array; out-of-range blocks
            # contribute zero via in-kernel masking.
            return (jnp.minimum(c * inner + i, row_blocks - 1), 0)

        tile_spec = pl.BlockSpec((tile_rows, LANES), in_map)
        out_spec = pl.BlockSpec((None, 3, 8, LANES), lambda c, i: (c, 0, 0, 0))

        kernel = functools.partial(
            _ss_sums_kernel,
            tile_rows=tile_rows,
            chunk_rows=chunk_rows,
            rows=rows,
            inner=inner,
            needs_mask=needs_mask,
        )

        # Leading axis: actually shard across the two TensorCores on v7x via
        # CORE_PARALLEL; reduction axis stays "arbitrary" (resident acc block).
        sem0 = (pltpu.CORE_PARALLEL
                if (use_core_parallel and ncores > 1) else pltpu.ARBITRARY)

        sums = pl.pallas_call(
            kernel,
            out_shape=jax.ShapeDtypeStruct((ncores, 3, 8, LANES), jnp.float32),
            grid_spec=pltpu.PrefetchScalarGridSpec(
                num_scalar_prefetch=0,
                grid=(ncores, inner),
                in_specs=[tile_spec, tile_spec],
                out_specs=out_spec,
            ),
            compiler_params=pltpu.CompilerParams(
                dimension_semantics=(sem0, pltpu.ARBITRARY),
                vmem_limit_bytes=VMEM_LIMIT,
            ),
        )(x2d, t2d)

        # Final tiny cross-lane reduction done once, outside the hot loop.
        totals = jnp.sum(sums, axis=(0, 2, 3)) + tail

    s_xt, s_x, s_t = totals[0], totals[1], totals[2]
    n_f = jnp.float32(n)

    tp = s_xt
    fp = s_x - s_xt
    fn = s_t - s_xt
    tn = n_f - s_x - s_t + s_xt

    seloss = fn / (tp + fn)  # inf/nan when (tp+fn)==0 — matches PyTorch
    sploss = fp / (tn + fp)
    return seloss + sploss


def _reference(inputs, target):
    x = inputs.astype(jnp.float32)
    t = target.astype(jnp.float32)
    tp = jnp.sum(x * t)
    fp = jnp.sum((1.0 - t) * x)
    fn = jnp.sum(t * (1.0 - x))
    tn = jnp.sum((1.0 - x) * (1.0 - t))
    return fn / (tp + fn) + fp / (tn + fp)


if __name__ == "__main__":
    key = jax.random.PRNGKey(0)
    k1, k2 = jax.random.split(key)
    # Small NCHW-like shapes: batch=2, channels=4, spatial=16x16.
    shape = (2, 4, 16, 16)
    inputs = jax.random.uniform(k1, shape, dtype=jnp.float32)           # probabilities
    target = (jax.random.uniform(k2, shape) > 0.5).astype(jnp.float32)  # binary mask

    loss = jax.block_until_ready(ssloss(inputs, target))
    ref = jax.block_until_ready(_reference(inputs, target))

    assert jnp.allclose(loss, ref, rtol=1e-5, atol=1e-5), (loss, ref)
    print("KERNEL_OK")
</pallas_src>

<mosaic_0001>
module attributes {stable_mosaic.version = 11 : i64} {
  func.func @_ss_sums_kernel(%arg0: i32, %arg1: i32, %arg2: memref<16x128xf32, #tpu.memory_space<vmem>>, %arg3: memref<16x128xf32, #tpu.memory_space<vmem>>, %arg4: memref<1x3x8x128xf32, #tpu.memory_space<vmem>>) attributes {dimension_semantics = [#tpu.dimension_semantics<arbitrary>, #tpu.dimension_semantics<arbitrary>], iteration_bounds = array<i64: 1, 1>, scalar_prefetch = 0 : i64, scratch_operands = 0 : i64, tpu.core_type = #tpu.core_type<tc>, window_params = [{transform_indices = @transform_0, window_bounds = array<i64: 16, 128>}, {transform_indices = @transform_1, window_bounds = array<i64: 16, 128>}, {transform_indices = @transform_2, window_bounds = array<i64: 1, 3, 8, 128>}]} {
    %c0_i32 = arith.constant 0 : i32
    %0 = arith.cmpi eq, %arg1, %c0_i32 : i32
    %1 = arith.extui %0 : i1 to i32
    %c0_i32_0 = arith.constant 0 : i32
    %2 = arith.cmpi ne, %1, %c0_i32_0 : i32
    scf.if %2 {
      %cst_28 = arith.constant 0.000000e+00 : f32
      %30 = vector.broadcast %cst_28 : f32 to vector<3x8x128xf32>
      %c0_29 = arith.constant 0 : index
      %c0_30 = arith.constant 0 : index
      %c0_31 = arith.constant 0 : index
      %c0_32 = arith.constant 0 : index
      %31 = vector.load %arg4[%c0_29, %c0_30, %c0_31, %c0_32] : memref<1x3x8x128xf32, #tpu.memory_space<vmem>>, vector<1x3x8x128xf32>
      %32 = vector.shape_cast %31 : vector<1x3x8x128xf32> to vector<3x8x128xf32>
      %33 = vector.shape_cast %30 : vector<3x8x128xf32> to vector<1x3x8x128xf32>
      tpu.vector_store %arg4[%c0_29, %c0_30, %c0_31, %c0_32], %33 {strides = array<i32>} : memref<1x3x8x128xf32, #tpu.memory_space<vmem>>, vector<1x3x8x128xf32>,
    } else {
    }
    %c0 = arith.constant 0 : index
    %c0_1 = arith.constant 0 : index
    %3 = vector.load %arg2[%c0, %c0_1] : memref<16x128xf32, #tpu.memory_space<vmem>>, vector<16x128xf32>
    %c0_2 = arith.constant 0 : index
    %c0_3 = arith.constant 0 : index
    %4 = vector.load %arg3[%c0_2, %c0_3] : memref<16x128xf32, #tpu.memory_space<vmem>>, vector<16x128xf32>
    %5 = arith.mulf %3, %4 : vector<16x128xf32>
    %6 = vector.shape_cast %5 : vector<16x128xf32> to vector<2x8x128xf32>
    %cst = arith.constant dense<0.000000e+00> : vector<8x128xf32>
    %7 = vector.multi_reduction <add>, %6, %cst [0] : vector<2x8x128xf32> to vector<8x128xf32>
    %8 = vector.shape_cast %3 : vector<16x128xf32> to vector<2x8x128xf32>
    %cst_4 = arith.constant dense<0.000000e+00> : vector<8x128xf32>
    %9 = vector.multi_reduction <add>, %8, %cst_4 [0] : vector<2x8x128xf32> to vector<8x128xf32>
    %10 = vector.shape_cast %4 : vector<16x128xf32> to vector<2x8x128xf32>
    %cst_5 = arith.constant dense<0.000000e+00> : vector<8x128xf32>
    %11 = vector.multi_reduction <add>, %10, %cst_5 [0] : vector<2x8x128xf32> to vector<8x128xf32>
    %c0_6 = arith.constant 0 : index
    %c0_7 = arith.constant 0 : index
    %c0_8 = arith.constant 0 : index
    %c0_9 = arith.constant 0 : index
    %12 = vector.load %arg4[%c0_6, %c0_7, %c0_8, %c0_9] : memref<1x3x8x128xf32, #tpu.memory_space<vmem>>, vector<1x1x8x128xf32>
    %13 = vector.shape_cast %12 : vector<1x1x8x128xf32> to vector<8x128xf32>
    %14 = arith.addf %13, %7 : vector<8x128xf32>
    %c0_10 = arith.constant 0 : index
    %c0_11 = arith.constant 0 : index
    %c0_12 = arith.constant 0 : index
    %c0_13 = arith.constant 0 : index
    %15 = vector.load %arg4[%c0_10, %c0_11, %c0_12, %c0_13] : memref<1x3x8x128xf32, #tpu.memory_space<vmem>>, vector<1x1x8x128xf32>
    %16 = vector.shape_cast %15 : vector<1x1x8x128xf32> to vector<8x128xf32>
    %17 = vector.shape_cast %14 : vector<8x128xf32> to vector<1x1x8x128xf32>
    tpu.vector_store %arg4[%c0_10, %c0_11, %c0_12, %c0_13], %17 {strides = array<i32>} : memref<1x3x8x128xf32, #tpu.memory_space<vmem>>, vector<1x1x8x128xf32>,
    %c0_14 = arith.constant 0 : index
    %c1 = arith.constant 1 : index
    %c0_15 = arith.constant 0 : index
    %c0_16 = arith.constant 0 : index
    %18 = vector.load %arg4[%c0_14, %c1, %c0_15, %c0_16] : memref<1x3x8x128xf32, #tpu.memory_space<vmem>>, vector<1x1x8x128xf32>
    %19 = vector.shape_cast %18 : vector<1x1x8x128xf32> to vector<8x128xf32>
    %20 = arith.addf %19, %9 : vector<8x128xf32>
    %c0_17 = arith.constant 0 : index
    %c1_18 = arith.constant 1 : index
    %c0_19 = arith.constant 0 : index
    %c0_20 = arith.constant 0 : index
    %21 = vector.load %arg4[%c0_17, %c1_18, %c0_19, %c0_20] : memref<1x3x8x128xf32, #tpu.memory_space<vmem>>, vector<1x1x8x128xf32>
    %22 = vector.shape_cast %21 : vector<1x1x8x128xf32> to vector<8x128xf32>
    %23 = vector.shape_cast %20 : vector<8x128xf32> to vector<1x1x8x128xf32>
    tpu.vector_store %arg4[%c0_17, %c1_18, %c0_19, %c0_20], %23 {strides = array<i32>} : memref<1x3x8x128xf32, #tpu.memory_space<vmem>>, vector<1x1x8x128xf32>,
    %c0_21 = arith.constant 0 : index
    %c2 = arith.constant 2 : index
    %c0_22 = arith.constant 0 : index
    %c0_23 = arith.constant 0 : index
    %24 = vector.load %arg4[%c0_21, %c2, %c0_22, %c0_23] : memref<1x3x8x128xf32, #tpu.memory_space<vmem>>, vector<1x1x8x128xf32>
    %25 = vector.shape_cast %24 : vector<1x1x8x128xf32> to vector<8x128xf32>
    %26 = arith.addf %25, %11 : vector<8x128xf32>
    %c0_24 = arith.constant 0 : index
    %c2_25 = arith.constant 2 : index
    %c0_26 = arith.constant 0 : index
    %c0_27 = arith.constant 0 : index
    %27 = vector.load %arg4[%c0_24, %c2_25, %c0_26, %c0_27] : memref<1x3x8x128xf32, #tpu.memory_space<vmem>>, vector<1x1x8x128xf32>
    %28 = vector.shape_cast %27 : vector<1x1x8x128xf32> to vector<8x128xf32>
    %29 = vector.shape_cast %26 : vector<8x128xf32> to vector<1x1x8x128xf32>
    tpu.vector_store %arg4[%c0_24, %c2_25, %c0_26, %c0_27], %29 {strides = array<i32>} : memref<1x3x8x128xf32, #tpu.memory_space<vmem>>, vector<1x1x8x128xf32>,
    return
  }
  func.func @transform_0(%arg0: i32, %arg1: i32) -> (i32, i32) {
    %c1_i32 = arith.constant 1 : i32
    %0 = arith.muli %arg0, %c1_i32 : i32
    %1 = arith.addi %0, %arg1 : i32
    %c0_i32 = arith.constant 0 : i32
    %2 = arith.minsi %1, %c0_i32 : i32
    %c0_i32_0 = arith.constant 0 : i32
    %c0_i32_1 = arith.constant 0 : i32
    return %2, %c0_i32_0 : i32, i32
  }
  func.func @transform_1(%arg0: i32, %arg1: i32) -> (i32, i32) {
    %c1_i32 = arith.constant 1 : i32
    %0 = arith.muli %arg0, %c1_i32 : i32
    %1 = arith.addi %0, %arg1 : i32
    %c0_i32 = arith.constant 0 : i32
    %2 = arith.minsi %1, %c0_i32 : i32
    %c0_i32_0 = arith.constant 0 : i32
    %c0_i32_1 = arith.constant 0 : i32
    return %2, %c0_i32_0 : i32, i32
  }
  func.func @transform_2(%arg0: i32, %arg1: i32) -> (i32, i32, i32, i32) {
    %c0_i32 = arith.constant 0 : i32
    %c0_i32_0 = arith.constant 0 : i32
    %c0_i32_1 = arith.constant 0 : i32
    %c0_i32_2 = arith.constant 0 : i32
    return %arg0, %c0_i32, %c0_i32_0, %c0_i32_1 : i32, i32, i32, i32
  }
}

</mosaic_0001>

<llo_original>
// kernel: tpu_custom_call.1
$region0: #{tpu_custom_call.1}
  #allocation0 [shape = 'u32[]', space=smem, size = 0x4, offset = 0x4, fixed_abs, tag = 'smem constant byte address 0x4 - core index']
  #allocation1 [shape = 'u32[144,128]{1,0:T(1,128)}', space=vmem, size = 0x12000, scoped, tag = 'internal scratch']
  %s0 = inlined_call_operand.hbm [shape: f32[16,128], index: 0, kind: input, shape index: {}]
  %s1 = inlined_call_operand.hbm [shape: f32[16,128], index: 1, kind: input, shape index: {}]
  %s2 = inlined_call_operand.hbm [shape: f32[1,3,8,128], index: 2, kind: output, shape index: {}]
  %s3 = sld [smem:[#allocation0]]
  $region30: #{tpu_custom_call.1} parent=0
    _
  %s5 = ssub.s32 1, %s3
  %s6 = scalar_select 0, %s5, %s3
  $region1: #{tpu_custom_call.1} parent=0
    #allocation2 [shape = 'u8[8192]{0}', space=vmem, size = 0x2000, scoped, tag = 'input window, operand 0, single buffered']
    #allocation3 [shape = 's32[1]{0}', space=sflag, size = 0x4, scoped, tag = 'scoped memory for tpu_custom_call.1']
    #allocation4 [shape = 's32[1]{0}', space=sflag, size = 0x4, scoped, tag = 'scoped memory for tpu_custom_call.1']
    #allocation5 [shape = 'u8[8192]{0}', space=vmem, size = 0x2000, scoped, tag = 'input window, operand 1, single buffered']
    #allocation6 [shape = 's32[1]{0}', space=sflag, size = 0x4, scoped, tag = 'scoped memory for tpu_custom_call.1']
    #allocation7 [shape = 'u8[12288]{0}', space=vmem, size = 0x3000, scoped, tag = 'output window, operand 0, single buffered']
    %7 = vsyncpa [#allocation3], 0
    %8 = vsyncpa [#allocation6], 0
    %9 = vsyncpa [#allocation4], 0
    // Predicated region
    $region2: #{tpu_custom_call.1} parent=1 // pred_check
      _
    $region3: #{tpu_custom_call.1} parent=1 // pred_check_branch
      %11 = sbr.rel (0) target = $region5
    $region4: #{tpu_custom_call.1} parent=1 // pred_region
      %s12 = sadd.s32 0, 0
      %p13 = scmp.lt.s32.totalorder %s12, 0
      %s14 = scalar_select %p13, %s12, 0
      %s15 = smul.u32 2, %s14
      %s17 = ssub.s32 256, 256
      %18 = vsyncadd [#allocation3], %s17
      %s19 = smul.addr %s15, 128
      %s20 = scalar_lea.hbm %s0, %s19
      %s21 = sshll.u32 [#allocation2], 4
      %s22 = int_to_ptr.vmem [resolvable:$true] %s21
      %27 = dma.hbm_to_vmem [thread:$0]  %s20, 256, %s22, [#allocation3], 128, 128, 8
    $region5: #{tpu_custom_call.1} parent=1 // pred_fallthru
      _
    // Predicated region
    $region6: #{tpu_custom_call.1} parent=1 // pred_check
      _
    $region7: #{tpu_custom_call.1} parent=1 // pred_check_branch
      %29 = sbr.rel (0) target = $region9
    $region8: #{tpu_custom_call.1} parent=1 // pred_region
      %s30 = sadd.s32 0, 0
      %p31 = scmp.lt.s32.totalorder %s30, 0
      %s32 = scalar_select %p31, %s30, 0
      %s33 = smul.u32 2, %s32
      %s35 = ssub.s32 256, 256
      %36 = vsyncadd [#allocation6], %s35
      %s37 = smul.addr %s33, 128
      %s38 = scalar_lea.hbm %s1, %s37
      %s39 = sshll.u32 [#allocation5], 4
      %s40 = int_to_ptr.vmem [resolvable:$true] %s39
      %45 = dma.hbm_to_vmem [thread:$0]  %s38, 256, %s40, [#allocation6], 128, 128, 8
    $region9: #{tpu_custom_call.1} parent=1 // pred_fallthru
      _
    // Predicated region
    $region10: #{tpu_custom_call.1} parent=1 // pred_check
      _
    $region11: #{tpu_custom_call.1} parent=1 // pred_check_branch
      %47 = sbr.rel (0) target = $region13
    $region12: #{tpu_custom_call.1} parent=1 // pred_region
      %48 = dma.done [#allocation3], 256
    $region13: #{tpu_custom_call.1} parent=1 // pred_fallthru
      _
    // Predicated region
    $region14: #{tpu_custom_call.1} parent=1 // pred_check
      _
    $region15: #{tpu_custom_call.1} parent=1 // pred_check_branch
      %50 = sbr.rel (0) target = $region17
    $region16: #{tpu_custom_call.1} parent=1 // pred_region
      %51 = dma.done [#allocation6], 256
    $region17: #{tpu_custom_call.1} parent=1 // pred_fallthru
      _
    %s52 = sadd.s32 0, 0
    %p53 = scmp.lt.s32.totalorder %s52, 0
    %s54 = scalar_select %p53, %s52, 0
    %s55 = smul.u32 2, %s54
    %s56 = sadd.s32 0, 0
    %p57 = scmp.lt.s32.totalorder %s56, 0
    %s58 = scalar_select %p57, %s56, 0
    %s59 = smul.u32 2, %s58
    %p60 = scmp.eq.s32.totalorder 0, 0
    // Predicated region
    $region18: #{tpu_custom_call.1} parent=1 // pred_check
      %p61 = pneg %p60
    $region19: #{tpu_custom_call.1} parent=1 // pred_check_branch
      %63 = sbr.rel (%p61) target = $region21
    $region20: #{tpu_custom_call.1} parent=1 // pred_region
      %64 = vst [vmem:[#allocation7] sm:$0xff] 0.0
      %65 = vst [vmem:[#allocation7 + $0x8] sm:$0xff] 0.0
      %66 = vst [vmem:[#allocation7 + $0x10] sm:$0xff] 0.0
    $region21: #{tpu_custom_call.1} parent=1 // pred_fallthru
      _
    %v67 = vld [vmem:[#allocation2] sm:$0xff]
    %v68 = vld [vmem:[#allocation2 + $0x8] sm:$0xff]
    %v69 = vld [vmem:[#allocation5] sm:$0xff]
    %v70 = vld [vmem:[#allocation5 + $0x8] sm:$0xff]
    %v71 = vmul.f32 %v67, %v69
    %v72 = vmul.f32 %v68, %v70
    %v73 = vadd.f32 %v71, %v72
    %v74 = vadd.f32 %v67, %v68
    %v75 = vadd.f32 %v69, %v70
    %v76 = vld [vmem:[#allocation7] sm:$0xff]
    %v77 = vadd.f32 %v76, %v73
    %78 = vst [vmem:[#allocation7] sm:$0xff] %v77
    %s79 = scalar_lea.vmem [#allocation7], 8
    %v80 = vld [vmem:[%s79] sm:$0xff]
    %v81 = vadd.f32 %v80, %v74
    %82 = vst [vmem:[%s79] sm:$0xff] %v81
    %s83 = scalar_lea.vmem [#allocation7], 16
    %v84 = vld [vmem:[%s83] sm:$0xff]
    %v85 = vadd.f32 %v84, %v75
    %86 = vst [vmem:[%s83] sm:$0xff] %v85
    // Predicated region
    $region22: #{tpu_custom_call.1} parent=1 // pred_check
      _
    $region23: #{tpu_custom_call.1} parent=1 // pred_check_branch
      %88 = sbr.rel (0) target = $region25
    $region24: #{tpu_custom_call.1} parent=1 // pred_region
      %s90 = ssub.s32 384, 384
      %91 = vsyncadd [#allocation4], %s90
      %s92 = sshll.u32 [#allocation7], 4
      %s93 = int_to_ptr.vmem [resolvable:$true] %s92
      %98 = dma.vmem_to_hbm [thread:$0]  %s93, 384, %s2, [#allocation4], 128, 128, 8
    $region25: #{tpu_custom_call.1} parent=1 // pred_fallthru
      _
    // Predicated region
    $region26: #{tpu_custom_call.1} parent=1 // pred_check
      _
    $region27: #{tpu_custom_call.1} parent=1 // pred_check_branch
      %100 = sbr.rel (0) target = $region29
    $region28: #{tpu_custom_call.1} parent=1 // pred_region
      %101 = dma.done [#allocation4], 384
    $region29: #{tpu_custom_call.1} parent=1 // pred_fallthru
      _
    %102 = vsyncpa [#allocation3], 1
    %103 = vsyncpa [#allocation6], 1
    %104 = vsyncpa [#allocation4], 1

</llo_original>
